<compile_context>
chip_gen: v5e
topology: v5e:2x2
jax: 0.10.0
libtpu: 0.0.40
codegen_flags: <defaults>
</compile_context>

<pallas_src>
import functools

import numpy as np
import jax
import jax.numpy as jnp
from jax.experimental import pallas as pl
from jax.experimental.pallas import tpu as pltpu

# Module "parameters" (deterministic, from __init__): vel_resize=0.5, ndims=2
VEL_RESIZE = 0.5
NDIMS = 2                      # -> mode = 'bilinear'
FACTOR = 1.0 / VEL_RESIZE      # 2.0  (> 1 branch of forward)


def _interp_matrix(in_size: int, out_size: int) -> np.ndarray:
    """align_corners=True linear interpolation matrix of shape (out_size, in_size)."""
    W = np.zeros((out_size, in_size), dtype=np.float32)
    if out_size == 1:
        W[0, 0] = 1.0
        return W
    for i in range(out_size):
        src = i * (in_size - 1) / (out_size - 1)
        i0 = min(int(np.floor(src)), in_size - 1)
        i1 = min(i0 + 1, in_size - 1)
        w1 = src - i0
        w0 = 1.0 - w1
        W[i, i0] += w0
        W[i, i1] += w1
    return W


def _num_tensorcores_per_chip() -> int:
    """2 TensorCores per chip only on v7x; v5e/v6e are single-TC. Default to 1."""
    try:
        kind = jax.devices()[0].device_kind.lower()
    except Exception:
        return 1
    return 2 if ("v7" in kind or "7x" in kind) else 1


def _resize_kernel(x_ref, wwt_ref, wh_ref, o_ref):
    # x_ref:   (TM, H, W)         plane tile of the input field
    # wwt_ref: (W, W_out)         width-resize weights (transposed), f32
    # wh_ref:  (H_out, H)         height-resize weights with `factor` folded in, f32
    # o_ref:   (TM, H_out, W_out) plane tile of the resized + rescaled field
    TM, H, W = x_ref.shape
    W_out = wwt_ref.shape[1]
    H_out = wh_ref.shape[0]

    x = x_ref[...].astype(jnp.float32)

    # Step 1: width resize -- one plain MXU matmul over all plane rows at once.
    tmp = jnp.dot(x.reshape(TM * H, W), wwt_ref[...],
                  preferred_element_type=jnp.float32)            # (TM*H, W_out)
    tmp = tmp.reshape(TM, H, W_out)

    # Step 2: height resize -- true batched matmul over the plane axis
    # (broadcasting wh keeps the dot_general batched => no in-kernel transpose).
    wh_b = jnp.broadcast_to(wh_ref[...][None, :, :], (TM, H_out, H))
    out = jnp.einsum('moh,mhp->mop', wh_b, tmp,
                     preferred_element_type=jnp.float32)         # (TM, H_out, W_out)

    o_ref[...] = out.astype(o_ref.dtype)


def resize_transform(x: jax.Array, vel_resize: float = VEL_RESIZE) -> jax.Array:
    """Pallas implementation of ResizeTransform.forward for ndims=2 (NCHW input)."""
    factor = 1.0 / vel_resize
    if factor == 1.0:
        return x  # PyTorch forward is a no-op in this case

    B, C, H, W = x.shape
    # F.interpolate with scale_factor: out_size = floor(in_size * scale_factor)
    H_out = int(np.floor(H * factor))
    W_out = int(np.floor(W * factor))
    M = B * C

    # Separable align_corners=True interpolation weights; rescale folded into Wh.
    wh = jnp.asarray(float(factor) * _interp_matrix(H, H_out), dtype=jnp.float32)  # (H_out, H)
    wwt = jnp.asarray(_interp_matrix(W, W_out).T, dtype=jnp.float32)               # (W, W_out)

    x3 = x.reshape(M, H, W)   # contiguous reshape, free

    # Single grid step on 1-TC chips (v5e/v6e); split planes across both
    # TensorCores only on v7x.  Weights use a constant index map (not re-DMA'd).
    n_tc = _num_tensorcores_per_chip()
    n_splits = n_tc if (n_tc > 1 and M >= n_tc and M % n_tc == 0) else 1
    TM = M // n_splits

    itemsize = np.dtype(x.dtype).itemsize
    flops = 2 * M * H * W * W_out + 2 * M * H_out * H * W_out
    bytes_accessed = ((M * H * W + M * H_out * W_out) * itemsize
                      + (int(wh.size) + int(wwt.size)) * 4)

    # TODO(synk): for very large spatial sizes, additionally tile the grid over
    # H_out row-blocks to bound the VMEM footprint; unnecessary at these shapes.
    out3 = pl.pallas_call(
        _resize_kernel,
        out_shape=jax.ShapeDtypeStruct((M, H_out, W_out), x.dtype),
        grid_spec=pltpu.PrefetchScalarGridSpec(
            num_scalar_prefetch=0,
            grid=(n_splits,),
            in_specs=[
                pl.BlockSpec((TM, H, W), lambda m: (m, 0, 0)),     # plane tile
                pl.BlockSpec((W, W_out), lambda m: (0, 0)),        # shared width weights
                pl.BlockSpec((H_out, H), lambda m: (0, 0)),        # shared height weights
            ],
            out_specs=pl.BlockSpec((TM, H_out, W_out), lambda m: (m, 0, 0)),
        ),
        compiler_params=pltpu.CompilerParams(
            dimension_semantics=("parallel",)),
        cost_estimate=pl.CostEstimate(
            flops=flops, transcendentals=0, bytes_accessed=bytes_accessed),
    )(x3, wwt, wh)

    return out3.reshape(B, C, H_out, W_out)


# TODO(synk): ndims=1 ('linear') and ndims=3 ('trilinear') interpolation paths
# are not instantiated here (this module is used with ndims=2); the trilinear
# path would add a third separable matmul over the depth axis.


if __name__ == "__main__":
    key = jax.random.PRNGKey(0)
    B, C, H, W = 2, 4, 16, 16                 # small NCHW vector field
    x = jax.random.normal(key, (B, C, H, W), dtype=jnp.float32)

    out = resize_transform(x, vel_resize=VEL_RESIZE)
    out = jax.block_until_ready(out)

    # Pure-JAX reference using the same separable align_corners=True weights.
    H_out = int(np.floor(H * FACTOR))
    W_out = int(np.floor(W * FACTOR))
    wh = jnp.asarray(_interp_matrix(H, H_out))
    ww = jnp.asarray(_interp_matrix(W, W_out))
    ref = FACTOR * jnp.einsum("oi,bcij,pj->bcop", wh, x, ww)

    assert out.shape == (B, C, H_out, W_out), out.shape
    np.testing.assert_allclose(np.asarray(out), np.asarray(ref), rtol=1e-5, atol=1e-5)
    print("KERNEL_OK")
</pallas_src>

<mosaic_0001>
module attributes {stable_mosaic.version = 11 : i64} {
  func.func @_resize_kernel(%arg0: i32, %arg1: memref<8x16x16xf32, #tpu.memory_space<vmem>>, %arg2: memref<16x32xf32, #tpu.memory_space<vmem>>, %arg3: memref<32x16xf32, #tpu.memory_space<vmem>>, %arg4: memref<8x32x32xf32, #tpu.memory_space<vmem>>) attributes {dimension_semantics = [#tpu.dimension_semantics<parallel>], iteration_bounds = array<i64: 1>, scalar_prefetch = 0 : i64, scratch_operands = 0 : i64, tpu.core_type = #tpu.core_type<tc>, window_params = [{transform_indices = @transform_0, window_bounds = array<i64: 8, 16, 16>}, {pipeline_mode = #tpu.pipeline_mode<synchronous>, transform_indices = @transform_1, window_bounds = array<i64: 16, 32>}, {pipeline_mode = #tpu.pipeline_mode<synchronous>, transform_indices = @transform_2, window_bounds = array<i64: 32, 16>}, {transform_indices = @transform_3, window_bounds = array<i64: 8, 32, 32>}]} {
    %c0 = arith.constant 0 : index
    %c0_0 = arith.constant 0 : index
    %c0_1 = arith.constant 0 : index
    %0 = vector.load %arg1[%c0, %c0_0, %c0_1] : memref<8x16x16xf32, #tpu.memory_space<vmem>>, vector<8x16x16xf32>
    %1 = vector.shape_cast %0 : vector<8x16x16xf32> to vector<128x16xf32>
    %c0_2 = arith.constant 0 : index
    %c0_3 = arith.constant 0 : index
    %2 = vector.load %arg2[%c0_2, %c0_3] : memref<16x32xf32, #tpu.memory_space<vmem>>, vector<16x32xf32>
    %cst = arith.constant dense<0.000000e+00> : vector<128x32xf32>
    %3 = tpu.matmul %1, %2, %cst {dimension_numbers = #tpu.dot_dimension_numbers<[1], [0], [0], [1], [0, 0, 1, 1], [], []>} : vector<128x16xf32>, vector<16x32xf32>, vector<128x32xf32> -> vector<128x32xf32>
    %4 = vector.shape_cast %3 : vector<128x32xf32> to vector<8x16x32xf32>
    %c0_4 = arith.constant 0 : index
    %c0_5 = arith.constant 0 : index
    %5 = vector.load %arg3[%c0_4, %c0_5] : memref<32x16xf32, #tpu.memory_space<vmem>>, vector<32x16xf32>
    %6 = vector.shape_cast %5 : vector<32x16xf32> to vector<1x32x16xf32>
    %7 = vector.shape_cast %6 : vector<1x32x16xf32> to vector<1x32x16xf32>
    %8 = vector.broadcast %7 : vector<1x32x16xf32> to vector<8x32x16xf32>
    "tpu.trace_start"() <{level = 10 : i32, message = "moh,mhp->mop"}> : () -> ()
    %cst_6 = arith.constant dense<0.000000e+00> : vector<8x32x32xf32>
    %9 = tpu.matmul %8, %4, %cst_6 {dimension_numbers = #tpu.dot_dimension_numbers<[2], [1], [1], [2], [0, 0, 0, 1, 1, 2], [0], [0]>} : vector<8x32x16xf32>, vector<8x16x32xf32>, vector<8x32x32xf32> -> vector<8x32x32xf32>
    "tpu.trace_stop"() : () -> ()
    %c0_7 = arith.constant 0 : index
    %c0_8 = arith.constant 0 : index
    %c0_9 = arith.constant 0 : index
    %10 = vector.load %arg4[%c0_7, %c0_8, %c0_9] : memref<8x32x32xf32, #tpu.memory_space<vmem>>, vector<8x32x32xf32>
    tpu.vector_store %arg4[%c0_7, %c0_8, %c0_9], %9 {strides = array<i32>} : memref<8x32x32xf32, #tpu.memory_space<vmem>>, vector<8x32x32xf32>,
    return
  }
  func.func @transform_0(%arg0: i32) -> (i32, i32, i32) {
    %c0_i32 = arith.constant 0 : i32
    %c0_i32_0 = arith.constant 0 : i32
    %c0_i32_1 = arith.constant 0 : i32
    return %arg0, %c0_i32, %c0_i32_0 : i32, i32, i32
  }
  func.func @transform_1(%arg0: i32) -> (i32, i32) {
    %c0_i32 = arith.constant 0 : i32
    %c0_i32_0 = arith.constant 0 : i32
    %c0_i32_1 = arith.constant 0 : i32
    return %c0_i32, %c0_i32_0 : i32, i32
  }
  func.func @transform_2(%arg0: i32) -> (i32, i32) {
    %c0_i32 = arith.constant 0 : i32
    %c0_i32_0 = arith.constant 0 : i32
    %c0_i32_1 = arith.constant 0 : i32
    return %c0_i32, %c0_i32_0 : i32, i32
  }
  func.func @transform_3(%arg0: i32) -> (i32, i32, i32) {
    %c0_i32 = arith.constant 0 : i32
    %c0_i32_0 = arith.constant 0 : i32
    %c0_i32_1 = arith.constant 0 : i32
    return %arg0, %c0_i32, %c0_i32_0 : i32, i32, i32
  }
}

</mosaic_0001>

<llo_original>
// kernel: tpu_custom_call.1
$region0: #{tpu_custom_call.1}
  #allocation0 [shape = 'u32[]', space=smem, size = 0x4, offset = 0x4, fixed_abs, tag = 'smem constant byte address 0x4 - core index']
  #allocation1 [shape = 'u32[72,128]{1,0:T(1,128)}', space=vmem, size = 0x9000, scoped, tag = 'internal scratch']
  %s0 = inlined_call_operand.hbm [shape: f32[8,16,16], index: 0, kind: input, shape index: {}]
  %s1 = inlined_call_operand.vmem [shape: f32[16,32], index: 1, kind: input, shape index: {}]
  %s2 = inlined_call_operand.vmem [shape: f32[32,16], index: 2, kind: input, shape index: {}]
  %s3 = inlined_call_operand.hbm [shape: f32[8,32,32], index: 3, kind: output, shape index: {}]
  %s4 = sld [smem:[#allocation0]]
  $region26: #{tpu_custom_call.1} parent=0
    _
  %s6 = ssub.s32 1, %s4
  %s7 = scalar_select 0, %s6, %s4
  $region1: #{tpu_custom_call.1} parent=0
    #allocation2 [shape = 'u8[65536]{0}', space=vmem, size = 0x10000, scoped, tag = 'input window, operand 0, single buffered']
    #allocation3 [shape = 's32[1]{0}', space=sflag, size = 0x4, scoped, tag = 'scoped memory for tpu_custom_call.1']
    #allocation4 [shape = 's32[1]{0}', space=sflag, size = 0x4, scoped, tag = 'scoped memory for tpu_custom_call.1']
    #allocation5 [shape = 'u8[131072]{0}', space=vmem, size = 0x20000, scoped, tag = 'output window, operand 0, single buffered']
    %8 = vsyncpa [#allocation3], 0
    %9 = vsyncpa [#allocation4], 0
    // Predicated region
    $region2: #{tpu_custom_call.1} parent=1 // pred_check
      _
    $region3: #{tpu_custom_call.1} parent=1 // pred_check_branch
      %11 = sbr.rel (0) target = $region5
    $region4: #{tpu_custom_call.1} parent=1 // pred_region
      %13 = vsyncadd [#allocation3], 0
      %s14 = sshll.u32 %s0, 4
      %s15 = int_to_ptr.hbm [resolvable:$true] %s14
      %s16 = sshll.u32 [#allocation2], 4
      %s17 = int_to_ptr.vmem [resolvable:$true] %s16
      %22 = dma.hbm_to_vmem [thread:$0]  %s15, 2048, %s17, [#allocation3], 128, 128, 8
    $region5: #{tpu_custom_call.1} parent=1 // pred_fallthru
      _
    // Predicated region
    $region6: #{tpu_custom_call.1} parent=1 // pred_check
      _
    $region7: #{tpu_custom_call.1} parent=1 // pred_check_branch
      %24 = sbr.rel (0) target = $region9
    $region8: #{tpu_custom_call.1} parent=1 // pred_region
      _
    $region9: #{tpu_custom_call.1} parent=1 // pred_fallthru
      _
    // Predicated region
    $region10: #{tpu_custom_call.1} parent=1 // pred_check
      _
    $region11: #{tpu_custom_call.1} parent=1 // pred_check_branch
      %26 = sbr.rel (0) target = $region13
    $region12: #{tpu_custom_call.1} parent=1 // pred_region
      _
    $region13: #{tpu_custom_call.1} parent=1 // pred_fallthru
      _
    // Predicated region
    $region14: #{tpu_custom_call.1} parent=1 // pred_check
      _
    $region15: #{tpu_custom_call.1} parent=1 // pred_check_branch
      %28 = sbr.rel (0) target = $region17
    $region16: #{tpu_custom_call.1} parent=1 // pred_region
      %30 = dma.done [#allocation3], 2048
    $region17: #{tpu_custom_call.1} parent=1 // pred_fallthru
      _
    %v31 = vld [vmem:[#allocation2] sm:$0xff]
    %v32 = vld [vmem:[#allocation2 + $0x8] sm:$0xff]
    %v33 = vld [vmem:[#allocation2 + $0x10] sm:$0xff]
    %v34 = vld [vmem:[#allocation2 + $0x18] sm:$0xff]
    %v35 = vld [vmem:[#allocation2 + $0x20] sm:$0xff]
    %v36 = vld [vmem:[#allocation2 + $0x28] sm:$0xff]
    %v37 = vld [vmem:[#allocation2 + $0x30] sm:$0xff]
    %v38 = vld [vmem:[#allocation2 + $0x38] sm:$0xff]
    %v39 = vld [vmem:[#allocation2 + $0x40] sm:$0xff]
    %v40 = vld [vmem:[#allocation2 + $0x48] sm:$0xff]
    %v41 = vld [vmem:[#allocation2 + $0x50] sm:$0xff]
    %v42 = vld [vmem:[#allocation2 + $0x58] sm:$0xff]
    %v43 = vld [vmem:[#allocation2 + $0x60] sm:$0xff]
    %v44 = vld [vmem:[#allocation2 + $0x68] sm:$0xff]
    %v45 = vld [vmem:[#allocation2 + $0x70] sm:$0xff]
    %v46 = vld [vmem:[#allocation2 + $0x78] sm:$0xff]
    %v47 = vld [vmem:[%s1] sm:$0xff]
    %v48 = vld [vmem:[%s1 + $0x8] sm:$0xff]
    %vm49 = vcmask 130048
    %v51 = vsel %vm49, %v31, 0
    %v54 = vsel %vm49, %v32, 0
    %v57 = vsel %vm49, %v33, 0
    %v60 = vsel %vm49, %v34, 0
    %v63 = vsel %vm49, %v35, 0
    %v66 = vsel %vm49, %v36, 0
    %v69 = vsel %vm49, %v37, 0
    %v72 = vsel %vm49, %v38, 0
    %v75 = vsel %vm49, %v39, 0
    %v78 = vsel %vm49, %v40, 0
    %v81 = vsel %vm49, %v41, 0
    %v84 = vsel %vm49, %v42, 0
    %v87 = vsel %vm49, %v43, 0
    %v90 = vsel %vm49, %v44, 0
    %v93 = vsel %vm49, %v45, 0
    %v96 = vsel %vm49, %v46, 0
    %98 = vmatpush.msra.mxu0 0.0
    %99 = vmatpush.msra.mxu0 0.0
    %100 = vmatpush.msra.mxu0 0.0
    %101 = vmatpush.msra.mxu0 0.0
    %102 = vmatpush.msra.mxu0 0.0
    %103 = vmatpush.msra.mxu0 0.0
    %104 = vmatpush.msra.mxu0 0.0
    %105 = vmatpush.msra.mxu0 0.0
    %106 = vmatpush.msra.mxu0 0.0
    %107 = vmatpush.msra.mxu0 0.0
    %108 = vmatpush.msra.mxu0 0.0
    %109 = vmatpush.msra.mxu0 0.0
    %110 = vmatpush.msra.mxu0 0.0
    %111 = vmatpush.msra.mxu0 0.0
    %112 = vmatpush.msra.mxu0 %v48
    %113 = vmatpush.msra.mxu0 %v47
    %114 = vmatmul.f32.gmra.mxu0 %v51
    %v115 = vpop.f32.mrf.mxu0
    %v116 = vadd.f32 0.0, %v115
    %117 = vmatmul.f32.gmra.mxu0 %v54
    %v118 = vpop.f32.mrf.mxu0
    %v119 = vadd.f32 0.0, %v118
    %120 = vmatmul.f32.gmra.mxu0 %v57
    %v121 = vpop.f32.mrf.mxu0
    %v122 = vadd.f32 0.0, %v121
    %123 = vmatmul.f32.gmra.mxu0 %v60
    %v124 = vpop.f32.mrf.mxu0
    %v125 = vadd.f32 0.0, %v124
    %126 = vmatmul.f32.gmra.mxu0 %v63
    %v127 = vpop.f32.mrf.mxu0
    %v128 = vadd.f32 0.0, %v127
    %129 = vmatmul.f32.gmra.mxu0 %v66
    %v130 = vpop.f32.mrf.mxu0
    %v131 = vadd.f32 0.0, %v130
    %132 = vmatmul.f32.gmra.mxu0 %v69
    %v133 = vpop.f32.mrf.mxu0
    %v134 = vadd.f32 0.0, %v133
    %135 = vmatmul.f32.gmra.mxu0 %v72
    %v136 = vpop.f32.mrf.mxu0
    %v137 = vadd.f32 0.0, %v136
    %138 = vmatmul.f32.gmra.mxu0 %v75
    %v139 = vpop.f32.mrf.mxu0
    %v140 = vadd.f32 0.0, %v139
    %141 = vmatmul.f32.gmra.mxu0 %v78
    %v142 = vpop.f32.mrf.mxu0
    %v143 = vadd.f32 0.0, %v142
    %144 = vmatmul.f32.gmra.mxu0 %v81
    %v145 = vpop.f32.mrf.mxu0
    %v146 = vadd.f32 0.0, %v145
    %147 = vmatmul.f32.gmra.mxu0 %v84
    %v148 = vpop.f32.mrf.mxu0
    %v149 = vadd.f32 0.0, %v148
    %150 = vmatmul.f32.gmra.mxu0 %v87
    %v151 = vpop.f32.mrf.mxu0
    %v152 = vadd.f32 0.0, %v151
    %153 = vmatmul.f32.gmra.mxu0 %v90
    %v154 = vpop.f32.mrf.mxu0
    %v155 = vadd.f32 0.0, %v154
    %156 = vmatmul.f32.gmra.mxu0 %v93
    %v157 = vpop.f32.mrf.mxu0
    %v158 = vadd.f32 0.0, %v157
    %159 = vmatmul.f32.gmra.mxu0 %v96
    %v160 = vpop.f32.mrf.mxu0
    %v161 = vadd.f32 0.0, %v160
    %162 = vdwg.mxu0
    %v163 = vld [vmem:[%s2] sm:$0xff]
    %v164 = vld [vmem:[%s2 + $0x8] sm:$0xff]
    %v165 = vld [vmem:[%s2 + $0x10] sm:$0xff]
    %v166 = vld [vmem:[%s2 + $0x18] sm:$0xff]
    %v168 = vsel %vm49, %v163, 0
    %v171 = vsel %vm49, %v164, 0
    %v174 = vsel %vm49, %v165, 0
    %v177 = vsel %vm49, %v166, 0
    %179 = vmatpush.msra.mxu0 0.0
    %180 = vmatpush.msra.mxu0 0.0
    %181 = vmatpush.msra.mxu0 0.0
    %182 = vmatpush.msra.mxu0 0.0
    %183 = vmatpush.msra.mxu0 0.0
    %184 = vmatpush.msra.mxu0 0.0
    %185 = vmatpush.msra.mxu0 0.0
    %186 = vmatpush.msra.mxu0 0.0
    %187 = vmatpush.msra.mxu0 0.0
    %188 = vmatpush.msra.mxu0 0.0
    %189 = vmatpush.msra.mxu0 0.0
    %190 = vmatpush.msra.mxu0 0.0
    %191 = vmatpush.msra.mxu0 0.0
    %192 = vmatpush.msra.mxu0 0.0
    %193 = vmatpush.msra.mxu0 %v119
    %194 = vmatpush.msra.mxu0 %v116
    %195 = vmatmul.f32.gmra.mxu0 %v168
    %v196 = vpop.f32.mrf.mxu0
    %v197 = vadd.f32 0.0, %v196
    %198 = vmatmul.f32.gmra.mxu0 %v171
    %v199 = vpop.f32.mrf.mxu0
    %v200 = vadd.f32 0.0, %v199
    %201 = vmatmul.f32.gmra.mxu0 %v174
    %v202 = vpop.f32.mrf.mxu0
    %v203 = vadd.f32 0.0, %v202
    %204 = vmatmul.f32.gmra.mxu0 %v177
    %v205 = vpop.f32.mrf.mxu0
    %v206 = vadd.f32 0.0, %v205
    %207 = vdwg.mxu0
    %208 = vmatpush.msra.mxu0 0.0
    %209 = vmatpush.msra.mxu0 0.0
    %210 = vmatpush.msra.mxu0 0.0
    %211 = vmatpush.msra.mxu0 0.0
    %212 = vmatpush.msra.mxu0 0.0
    %213 = vmatpush.msra.mxu0 0.0
    %214 = vmatpush.msra.mxu0 0.0
    %215 = vmatpush.msra.mxu0 0.0
    %216 = vmatpush.msra.mxu0 0.0
    %217 = vmatpush.msra.mxu0 0.0
    %218 = vmatpush.msra.mxu0 0.0
    %219 = vmatpush.msra.mxu0 0.0
    %220 = vmatpush.msra.mxu0 0.0
    %221 = vmatpush.msra.mxu0 0.0
    %222 = vmatpush.msra.mxu0 %v125
    %223 = vmatpush.msra.mxu0 %v122
    %224 = vmatmul.f32.gmra.mxu0 %v168
    %v225 = vpop.f32.mrf.mxu0
    %v226 = vadd.f32 0.0, %v225
    %227 = vmatmul.f32.gmra.mxu0 %v171
    %v228 = vpop.f32.mrf.mxu0
    %v229 = vadd.f32 0.0, %v228
    %230 = vmatmul.f32.gmra.mxu0 %v174
    %v231 = vpop.f32.mrf.mxu0
    %v232 = vadd.f32 0.0, %v231
    %233 = vmatmul.f32.gmra.mxu0 %v177
    %v234 = vpop.f32.mrf.mxu0
    %v235 = vadd.f32 0.0, %v234
    %236 = vdwg.mxu0
    %237 = vmatpush.msra.mxu0 0.0
    %238 = vmatpush.msra.mxu0 0.0
    %239 = vmatpush.msra.mxu0 0.0
    %240 = vmatpush.msra.mxu0 0.0
    %241 = vmatpush.msra.mxu0 0.0
    %242 = vmatpush.msra.mxu0 0.0
    %243 = vmatpush.msra.mxu0 0.0
    %244 = vmatpush.msra.mxu0 0.0
    %245 = vmatpush.msra.mxu0 0.0
    %246 = vmatpush.msra.mxu0 0.0
    %247 = vmatpush.msra.mxu0 0.0
    %248 = vmatpush.msra.mxu0 0.0
    %249 = vmatpush.msra.mxu0 0.0
    %250 = vmatpush.msra.mxu0 0.0
    %251 = vmatpush.msra.mxu0 %v131
    %252 = vmatpush.msra.mxu0 %v128
    %253 = vmatmul.f32.gmra.mxu0 %v168
    %v254 = vpop.f32.mrf.mxu0
    %v255 = vadd.f32 0.0, %v254
    %256 = vmatmul.f32.gmra.mxu0 %v171
    %v257 = vpop.f32.mrf.mxu0
    %v258 = vadd.f32 0.0, %v257
    %259 = vmatmul.f32.gmra.mxu0 %v174
    %v260 = vpop.f32.mrf.mxu0
    %v261 = vadd.f32 0.0, %v260
    %262 = vmatmul.f32.gmra.mxu0 %v177
    %v263 = vpop.f32.mrf.mxu0
    %v264 = vadd.f32 0.0, %v263
    %265 = vdwg.mxu0
    %266 = vmatpush.msra.mxu0 0.0
    %267 = vmatpush.msra.mxu0 0.0
    %268 = vmatpush.msra.mxu0 0.0
    %269 = vmatpush.msra.mxu0 0.0
    %270 = vmatpush.msra.mxu0 0.0
    %271 = vmatpush.msra.mxu0 0.0
    %272 = vmatpush.msra.mxu0 0.0
    %273 = vmatpush.msra.mxu0 0.0
    %274 = vmatpush.msra.mxu0 0.0
    %275 = vmatpush.msra.mxu0 0.0
    %276 = vmatpush.msra.mxu0 0.0
    %277 = vmatpush.msra.mxu0 0.0
    %278 = vmatpush.msra.mxu0 0.0
    %279 = vmatpush.msra.mxu0 0.0
    %280 = vmatpush.msra.mxu0 %v137
    %281 = vmatpush.msra.mxu0 %v134
    %282 = vmatmul.f32.gmra.mxu0 %v168
    %v283 = vpop.f32.mrf.mxu0
    %v284 = vadd.f32 0.0, %v283
    %285 = vmatmul.f32.gmra.mxu0 %v171
    %v286 = vpop.f32.mrf.mxu0
    %v287 = vadd.f32 0.0, %v286
    %288 = vmatmul.f32.gmra.mxu0 %v174
    %v289 = vpop.f32.mrf.mxu0
    %v290 = vadd.f32 0.0, %v289
    %291 = vmatmul.f32.gmra.mxu0 %v177
    %v292 = vpop.f32.mrf.mxu0
    %v293 = vadd.f32 0.0, %v292
    %294 = vdwg.mxu0
    %295 = vmatpush.msra.mxu0 0.0
    %296 = vmatpush.msra.mxu0 0.0
    %297 = vmatpush.msra.mxu0 0.0
    %298 = vmatpush.msra.mxu0 0.0
    %299 = vmatpush.msra.mxu0 0.0
    %300 = vmatpush.msra.mxu0 0.0
    %301 = vmatpush.msra.mxu0 0.0
    %302 = vmatpush.msra.mxu0 0.0
    %303 = vmatpush.msra.mxu0 0.0
    %304 = vmatpush.msra.mxu0 0.0
    %305 = vmatpush.msra.mxu0 0.0
    %306 = vmatpush.msra.mxu0 0.0
    %307 = vmatpush.msra.mxu0 0.0
    %308 = vmatpush.msra.mxu0 0.0
    %309 = vmatpush.msra.mxu0 %v143
    %310 = vmatpush.msra.mxu0 %v140
    %311 = vmatmul.f32.gmra.mxu0 %v168
    %v312 = vpop.f32.mrf.mxu0
    %v313 = vadd.f32 0.0, %v312
    %314 = vmatmul.f32.gmra.mxu0 %v171
    %v315 = vpop.f32.mrf.mxu0
    %v316 = vadd.f32 0.0, %v315
    %317 = vmatmul.f32.gmra.mxu0 %v174
    %v318 = vpop.f32.mrf.mxu0
    %v319 = vadd.f32 0.0, %v318
    %320 = vmatmul.f32.gmra.mxu0 %v177
    %v321 = vpop.f32.mrf.mxu0
    %v322 = vadd.f32 0.0, %v321
    %323 = vdwg.mxu0
    %324 = vmatpush.msra.mxu0 0.0
    %325 = vmatpush.msra.mxu0 0.0
    %326 = vmatpush.msra.mxu0 0.0
    %327 = vmatpush.msra.mxu0 0.0
    %328 = vmatpush.msra.mxu0 0.0
    %329 = vmatpush.msra.mxu0 0.0
    %330 = vmatpush.msra.mxu0 0.0
    %331 = vmatpush.msra.mxu0 0.0
    %332 = vmatpush.msra.mxu0 0.0
    %333 = vmatpush.msra.mxu0 0.0
    %334 = vmatpush.msra.mxu0 0.0
    %335 = vmatpush.msra.mxu0 0.0
    %336 = vmatpush.msra.mxu0 0.0
    %337 = vmatpush.msra.mxu0 0.0
    %338 = vmatpush.msra.mxu0 %v149
    %339 = vmatpush.msra.mxu0 %v146
    %340 = vmatmul.f32.gmra.mxu0 %v168
    %v341 = vpop.f32.mrf.mxu0
    %v342 = vadd.f32 0.0, %v341
    %343 = vmatmul.f32.gmra.mxu0 %v171
    %v344 = vpop.f32.mrf.mxu0
    %v345 = vadd.f32 0.0, %v344
    %346 = vmatmul.f32.gmra.mxu0 %v174
    %v347 = vpop.f32.mrf.mxu0
    %v348 = vadd.f32 0.0, %v347
    %349 = vmatmul.f32.gmra.mxu0 %v177
    %v350 = vpop.f32.mrf.mxu0
    %v351 = vadd.f32 0.0, %v350
    %352 = vdwg.mxu0
    %353 = vmatpush.msra.mxu0 0.0
    %354 = vmatpush.msra.mxu0 0.0
    %355 = vmatpush.msra.mxu0 0.0
    %356 = vmatpush.msra.mxu0 0.0
    %357 = vmatpush.msra.mxu0 0.0
    %358 = vmatpush.msra.mxu0 0.0
    %359 = vmatpush.msra.mxu0 0.0
    %360 = vmatpush.msra.mxu0 0.0
    %361 = vmatpush.msra.mxu0 0.0
    %362 = vmatpush.msra.mxu0 0.0
    %363 = vmatpush.msra.mxu0 0.0
    %364 = vmatpush.msra.mxu0 0.0
    %365 = vmatpush.msra.mxu0 0.0
    %366 = vmatpush.msra.mxu0 0.0
    %367 = vmatpush.msra.mxu0 %v155
    %368 = vmatpush.msra.mxu0 %v152
    %369 = vmatmul.f32.gmra.mxu0 %v168
    %v370 = vpop.f32.mrf.mxu0
    %v371 = vadd.f32 0.0, %v370
    %372 = vmatmul.f32.gmra.mxu0 %v171
    %v373 = vpop.f32.mrf.mxu0
    %v374 = vadd.f32 0.0, %v373
    %375 = vmatmul.f32.gmra.mxu0 %v174
    %v376 = vpop.f32.mrf.mxu0
    %v377 = vadd.f32 0.0, %v376
    %378 = vmatmul.f32.gmra.mxu0 %v177
    %v379 = vpop.f32.mrf.mxu0
    %v380 = vadd.f32 0.0, %v379
    %381 = vdwg.mxu0
    %382 = vmatpush.msra.mxu0 0.0
    %383 = vmatpush.msra.mxu0 0.0
    %384 = vmatpush.msra.mxu0 0.0
    %385 = vmatpush.msra.mxu0 0.0
    %386 = vmatpush.msra.mxu0 0.0
    %387 = vmatpush.msra.mxu0 0.0
    %388 = vmatpush.msra.mxu0 0.0
    %389 = vmatpush.msra.mxu0 0.0
    %390 = vmatpush.msra.mxu0 0.0
    %391 = vmatpush.msra.mxu0 0.0
    %392 = vmatpush.msra.mxu0 0.0
    %393 = vmatpush.msra.mxu0 0.0
    %394 = vmatpush.msra.mxu0 0.0
    %395 = vmatpush.msra.mxu0 0.0
    %396 = vmatpush.msra.mxu0 %v161
    %397 = vmatpush.msra.mxu0 %v158
    %398 = vmatmul.f32.gmra.mxu0 %v168
    %v399 = vpop.f32.mrf.mxu0
    %v400 = vadd.f32 0.0, %v399
    %401 = vmatmul.f32.gmra.mxu0 %v171
    %v402 = vpop.f32.mrf.mxu0
    %v403 = vadd.f32 0.0, %v402
    %404 = vmatmul.f32.gmra.mxu0 %v174
    %v405 = vpop.f32.mrf.mxu0
    %v406 = vadd.f32 0.0, %v405
    %407 = vmatmul.f32.gmra.mxu0 %v177
    %v408 = vpop.f32.mrf.mxu0
    %v409 = vadd.f32 0.0, %v408
    %410 = vdwg.mxu0
    %vm411 = vcmask 261120
    %412 = vst.msk [vmem:[#allocation5] sm:$0xff] %vm411, %v197
    %413 = vst.msk [vmem:[#allocation5 + $0x8] sm:$0xff] %vm411, %v200
    %414 = vst.msk [vmem:[#allocation5 + $0x10] sm:$0xff] %vm411, %v203
    %415 = vst.msk [vmem:[#allocation5 + $0x18] sm:$0xff] %vm411, %v206
    %416 = vst.msk [vmem:[#allocation5 + $0x20] sm:$0xff] %vm411, %v226
    %417 = vst.msk [vmem:[#allocation5 + $0x28] sm:$0xff] %vm411, %v229
    %418 = vst.msk [vmem:[#allocation5 + $0x30] sm:$0xff] %vm411, %v232
    %419 = vst.msk [vmem:[#allocation5 + $0x38] sm:$0xff] %vm411, %v235
    %420 = vst.msk [vmem:[#allocation5 + $0x40] sm:$0xff] %vm411, %v255
    %421 = vst.msk [vmem:[#allocation5 + $0x48] sm:$0xff] %vm411, %v258
    %422 = vst.msk [vmem:[#allocation5 + $0x50] sm:$0xff] %vm411, %v261
    %423 = vst.msk [vmem:[#allocation5 + $0x58] sm:$0xff] %vm411, %v264
    %424 = vst.msk [vmem:[#allocation5 + $0x60] sm:$0xff] %vm411, %v284
    %425 = vst.msk [vmem:[#allocation5 + $0x68] sm:$0xff] %vm411, %v287
    %426 = vst.msk [vmem:[#allocation5 + $0x70] sm:$0xff] %vm411, %v290
    %427 = vst.msk [vmem:[#allocation5 + $0x78] sm:$0xff] %vm411, %v293
    %428 = vst.msk [vmem:[#allocation5 + $0x80] sm:$0xff] %vm411, %v313
    %429 = vst.msk [vmem:[#allocation5 + $0x88] sm:$0xff] %vm411, %v316
    %430 = vst.msk [vmem:[#allocation5 + $0x90] sm:$0xff] %vm411, %v319
    %431 = vst.msk [vmem:[#allocation5 + $0x98] sm:$0xff] %vm411, %v322
    %432 = vst.msk [vmem:[#allocation5 + $0xa0] sm:$0xff] %vm411, %v342
    %433 = vst.msk [vmem:[#allocation5 + $0xa8] sm:$0xff] %vm411, %v345
    %434 = vst.msk [vmem:[#allocation5 + $0xb0] sm:$0xff] %vm411, %v348
    %435 = vst.msk [vmem:[#allocation5 + $0xb8] sm:$0xff] %vm411, %v351
    %436 = vst.msk [vmem:[#allocation5 + $0xc0] sm:$0xff] %vm411, %v371
    %437 = vst.msk [vmem:[#allocation5 + $0xc8] sm:$0xff] %vm411, %v374
    %438 = vst.msk [vmem:[#allocation5 + $0xd0] sm:$0xff] %vm411, %v377
    %439 = vst.msk [vmem:[#allocation5 + $0xd8] sm:$0xff] %vm411, %v380
    %440 = vst.msk [vmem:[#allocation5 + $0xe0] sm:$0xff] %vm411, %v400
    %441 = vst.msk [vmem:[#allocation5 + $0xe8] sm:$0xff] %vm411, %v403
    %442 = vst.msk [vmem:[#allocation5 + $0xf0] sm:$0xff] %vm411, %v406
    %443 = vst.msk [vmem:[#allocation5 + $0xf8] sm:$0xff] %vm411, %v409
    // Predicated region
    $region18: #{tpu_custom_call.1} parent=1 // pred_check
      _
    $region19: #{tpu_custom_call.1} parent=1 // pred_check_branch
      %445 = sbr.rel (0) target = $region21
    $region20: #{tpu_custom_call.1} parent=1 // pred_region
      %447 = vsyncadd [#allocation4], 0
      %s448 = sshll.u32 [#allocation5], 4
      %s449 = int_to_ptr.vmem [resolvable:$true] %s448
      %s450 = sshll.u32 %s3, 4
      %s451 = int_to_ptr.hbm [resolvable:$true] %s450
      %456 = dma.vmem_to_hbm [thread:$0]  %s449, 4096, %s451, [#allocation4], 128, 128, 8
    $region21: #{tpu_custom_call.1} parent=1 // pred_fallthru
      _
    // Predicated region
    $region22: #{tpu_custom_call.1} parent=1 // pred_check
      _
    $region23: #{tpu_custom_call.1} parent=1 // pred_check_branch
      %458 = sbr.rel (0) target = $region25
    $region24: #{tpu_custom_call.1} parent=1 // pred_region
      %460 = dma.done [#allocation4], 4096
    $region25: #{tpu_custom_call.1} parent=1 // pred_fallthru
      _
    %461 = vsyncpa [#allocation3], 1
    %462 = vsyncpa [#allocation4], 1

</llo_original>
